<compile_context>
chip_gen: v5e
topology: v5e:2x2
jax: 0.10.0
libtpu: 0.0.40
codegen_flags: <defaults>
</compile_context>

<pallas_src>
import functools

import jax
import jax.numpy as jnp
from jax.experimental import pallas as pl
from jax.experimental.pallas import tpu as pltpu

LEAKY_SLOPE = 0.01   # nn.LeakyReLU default
BN_EPS = 1e-5        # nn.BatchNorm1d default
_TM_CAP = 2048       # max batch rows per grid step (fits VMEM with big margin)


def _round_up(n, m):
    return ((n + m - 1) // m) * m


def _cdiv(a, b):
    return -(-a // b)


def _pick_tm(batch):
    """Batch tile: big to amortize ~0.35us/step; >=2 steps for v7x megacore."""
    if batch <= 512:
        return batch                       # single step; full-dim block is legal
    steps = max(2, _cdiv(batch, _TM_CAP))  # at least 2 steps -> both v7x TCs used
    return _round_up(_cdiv(batch, steps), 16)   # multiple of 16 (bf16 sublanes)


# ---------------------------------------------------------------------------
# Pallas kernel:
#   (x_emb@w1e + x_cat@w1c + x_con@w1n + b1) -> LeakyReLU
#   -> @w2 + b2 -> LeakyReLU -> @w3 + b3     (all BN folded, dropout identity)
# ---------------------------------------------------------------------------
def _mlp_kernel(xe_ref, xc_ref, xn_ref,
                w1e_ref, w1c_ref, w1n_ref, b1_ref,
                w2_ref, b2_ref, w3_ref, b3_ref, o_ref):
    bf16 = jnp.bfloat16

    # layer_1 (input BN + bn1 pre-folded), split over the three input groups.
    h1 = jnp.dot(xe_ref[...], w1e_ref[...], preferred_element_type=jnp.float32)
    h1 = h1 + jnp.dot(xc_ref[...].astype(bf16), w1c_ref[...],
                      preferred_element_type=jnp.float32)
    h1 = h1 + jnp.dot(xn_ref[...].astype(bf16), w1n_ref[...],
                      preferred_element_type=jnp.float32)
    h1 = h1 + b1_ref[...]
    h1 = jnp.where(h1 > 0, h1, LEAKY_SLOPE * h1)

    # layer_2 -> LeakyReLU  (bn2 is applied AFTER this relu; folded into w3/b3)
    h2 = jnp.dot(h1.astype(bf16), w2_ref[...], preferred_element_type=jnp.float32)
    h2 = h2 + b2_ref[...]
    h2 = jnp.where(h2 > 0, h2, LEAKY_SLOPE * h2)

    # dropout(p=0.2): identity in eval mode
    # layer_out (bn2 pre-folded)
    out = jnp.dot(h2.astype(bf16), w3_ref[...], preferred_element_type=jnp.float32)
    out = out + b3_ref[...]
    o_ref[...] = out.astype(o_ref.dtype)     # bf16 store: halves HBM writeback


def _fused_mlp(x_emb, x_cat, x_con, w1e, w1c, w1n, b1, w2, b2, w3, b3):
    batch = x_emb.shape[0]
    de, dc, dn = x_emb.shape[1], x_cat.shape[1], x_con.shape[1]
    h1 = w1e.shape[1]
    h2 = w2.shape[1]
    n_out = w3.shape[1]          # already padded to a multiple of 128

    tm = _pick_tm(batch)
    grid = (_cdiv(batch, tm),)   # tail block: padded reads / masked writes

    row = lambda i: (i, 0)
    const = lambda i: (0, 0)     # weights/biases stay resident (DMA skipped after iter 0)

    # TODO(synk): weights are <100 KB total; single-buffering them
    # (pipeline_mode=pl.Buffered(1)) would only matter near the VMEM budget.
    return pl.pallas_call(
        _mlp_kernel,
        out_shape=jax.ShapeDtypeStruct((batch, n_out), jnp.bfloat16),
        grid=grid,
        in_specs=[
            pl.BlockSpec((tm, de), row),     # x_emb (bf16, batch-tiled)
            pl.BlockSpec((tm, dc), row),     # cat_data (f32, cast in-kernel)
            pl.BlockSpec((tm, dn), row),     # con_data (f32, cast in-kernel)
            pl.BlockSpec((de, h1), const),   # w1_emb
            pl.BlockSpec((dc, h1), const),   # w1_cat
            pl.BlockSpec((dn, h1), const),   # w1_con
            pl.BlockSpec((1, h1), const),    # b1
            pl.BlockSpec((h1, h2), const),   # w2
            pl.BlockSpec((1, h2), const),    # b2
            pl.BlockSpec((h2, n_out), const),  # w3
            pl.BlockSpec((1, n_out), const),   # b3
        ],
        out_specs=pl.BlockSpec((tm, n_out), row),
        compiler_params=pltpu.CompilerParams(
            dimension_semantics=("parallel",),
            vmem_limit_bytes=48 * 1024 * 1024),
    )(x_emb, x_cat, x_con, w1e, w1c, w1n, b1, w2, b2, w3, b3)


# ---------------------------------------------------------------------------
# Parameter construction (deterministic, synthetic)
# ---------------------------------------------------------------------------
def init_params(key, emb_dims, num_cat_feature, num_con_feature,
                num_class, num_hidden1, num_hidden2):
    num_embs = sum(y for _, y in emb_dims)
    d_in = num_embs + num_cat_feature + num_con_feature

    keys = jax.random.split(key, 32)
    ki = iter(range(32))

    params = {}
    # Embedding tables (padding_idx=0 -> row 0 zeroed)
    emb_tables = []
    for (n_emb, dim) in emb_dims:
        w = 0.1 * jax.random.normal(keys[next(ki)], (n_emb, dim), jnp.float32)
        w = w.at[0].set(0.0)
        emb_tables.append(w)
    params["emb_tables"] = emb_tables

    def bn(nf):
        return {
            "gamma": 1.0 + 0.1 * jax.random.normal(keys[next(ki)], (nf,), jnp.float32),
            "beta": 0.1 * jax.random.normal(keys[next(ki)], (nf,), jnp.float32),
            "mean": 0.1 * jax.random.normal(keys[next(ki)], (nf,), jnp.float32),
            "var": jnp.abs(1.0 + 0.1 * jax.random.normal(keys[next(ki)], (nf,), jnp.float32)),
        }

    params["bn_cat"] = bn(num_cat_feature)
    params["bn_con"] = bn(num_con_feature)
    params["bn1"] = bn(num_hidden1)
    params["bn2"] = bn(num_hidden2)

    def linear(din, dout):
        lim = 1.0 / jnp.sqrt(din)
        w = jax.random.uniform(keys[next(ki)], (din, dout), jnp.float32, -lim, lim)
        b = jax.random.uniform(keys[next(ki)], (dout,), jnp.float32, -lim, lim)
        return w, b

    params["w1"], params["b1"] = linear(d_in, num_hidden1)
    params["w2"], params["b2"] = linear(num_hidden1, num_hidden2)
    params["w3"], params["b3"] = linear(num_hidden2, num_class)
    return params


def _bn_fold(bn):
    scale = bn["gamma"] / jnp.sqrt(bn["var"] + BN_EPS)
    shift = bn["beta"] - bn["mean"] * scale
    return scale, shift


def fold_params(params):
    """One-time (outside jit) fold: BN affines -> linears, row-split w1, pad to 128 lanes."""
    num_embs = int(sum(t.shape[1] for t in params["emb_tables"]))
    num_cat = int(params["bn_cat"]["gamma"].shape[0])
    num_con = int(params["bn_con"]["gamma"].shape[0])

    cat_s, cat_sh = _bn_fold(params["bn_cat"])
    con_s, con_sh = _bn_fold(params["bn_con"])
    in_scale = jnp.concatenate([jnp.ones((num_embs,), jnp.float32), cat_s, con_s])
    in_shift = jnp.concatenate([jnp.zeros((num_embs,), jnp.float32), cat_sh, con_sh])

    bn1_s, bn1_sh = _bn_fold(params["bn1"])
    bn2_s, bn2_sh = _bn_fold(params["bn2"])

    w1, b1 = params["w1"], params["b1"]
    # bn1(in_affine(x) @ w1 + b1) == x @ w1_eff + b1_eff
    w1_eff = in_scale[:, None] * w1 * bn1_s[None, :]
    b1_eff = (in_shift @ w1 + b1) * bn1_s + bn1_sh

    w3, b3 = params["w3"], params["b3"]
    # (bn2(h)) @ w3 + b3 == h @ w3_eff + b3_eff
    w3_eff = bn2_s[:, None] * w3
    b3_eff = bn2_sh @ w3 + b3

    h1 = int(w1.shape[1])
    h2 = int(params["w2"].shape[1])
    num_class = int(w3.shape[1])
    h1_p = _round_up(h1, 128)
    h2_p = _round_up(h2, 128)
    n_out_p = _round_up(max(num_class, 1), 128)

    # Zero-pad hidden/output dims to 128 lanes (exact: padded h1/h2 columns get
    # zero bias -> stay 0 through LeakyReLU, and their w2/w3 rows are zero).
    w1_eff = jnp.pad(w1_eff, ((0, 0), (0, h1_p - h1)))
    b1_eff = jnp.pad(b1_eff, ((0, h1_p - h1),))
    w2_eff = jnp.pad(params["w2"], ((0, h1_p - h1), (0, h2_p - h2)))
    b2_eff = jnp.pad(params["b2"], ((0, h2_p - h2),))
    w3_eff = jnp.pad(w3_eff, ((0, h2_p - h2), (0, n_out_p - num_class)))
    b3_eff = jnp.pad(b3_eff, ((0, n_out_p - num_class),))

    # Row-split w1_eff so x never needs to be concatenated / re-materialized in HBM.
    w1_emb = w1_eff[:num_embs]
    w1_cat = w1_eff[num_embs:num_embs + num_cat]
    w1_con = w1_eff[num_embs + num_cat:]

    folded = {
        # bf16 tables -> gathered embedding block is bf16 in HBM (half traffic)
        "emb_tables": [t.astype(jnp.bfloat16) for t in params["emb_tables"]],
        "w1_emb": w1_emb.astype(jnp.bfloat16),
        "w1_cat": w1_cat.astype(jnp.bfloat16),
        "w1_con": w1_con.astype(jnp.bfloat16),
        "b1": b1_eff.reshape(1, -1).astype(jnp.float32),
        "w2": w2_eff.astype(jnp.bfloat16),
        "b2": b2_eff.reshape(1, -1).astype(jnp.float32),
        "w3": w3_eff.astype(jnp.bfloat16),
        "b3": b3_eff.reshape(1, -1).astype(jnp.float32),
    }
    return folded, num_class


# ---------------------------------------------------------------------------
# Forward pass (embedding gather glue + fused Pallas MLP)
# ---------------------------------------------------------------------------
@functools.partial(jax.jit, static_argnames=("num_class",))
def multiclass_forward(folded, emb_data, cat_data, con_data, *, num_class):
    # Embedding lookups (dropout on embeddings = identity in eval). Only the
    # small (batch, num_embs) bf16 block is materialized; cat/con go to the
    # kernel untouched (f32, cast in-kernel) — no full-x concat in HBM.
    # TODO(synk): the per-table gather itself stays as XLA glue.
    emb_outs = [tbl[emb_data[:, i]] for i, tbl in enumerate(folded["emb_tables"])]
    x_emb = jnp.concatenate(emb_outs, axis=1)

    out = _fused_mlp(x_emb,
                     cat_data.astype(jnp.float32), con_data.astype(jnp.float32),
                     folded["w1_emb"], folded["w1_cat"], folded["w1_con"], folded["b1"],
                     folded["w2"], folded["b2"],
                     folded["w3"], folded["b3"])
    # Slice off zero-padded class columns; cast tiny (batch, num_class) back to f32.
    return out[:, :num_class].astype(jnp.float32)


# ---------------------------------------------------------------------------
if __name__ == "__main__":
    key = jax.random.PRNGKey(0)

    # Small, module-consistent shapes
    batch = 8
    emb_dims = [(5, 4), (7, 5), (10, 6)]   # (cardinality, emb_dim) per cat-emb feature
    num_cat_feature = 16
    num_con_feature = 12
    num_class = 5
    num_hidden1 = 32
    num_hidden2 = 32

    kp, ke, kc, kn = jax.random.split(key, 4)
    params = init_params(kp, emb_dims, num_cat_feature, num_con_feature,
                         num_class, num_hidden1, num_hidden2)

    # One-time fold (eval-mode params are fixed): BN -> linears, split w1, pad dims.
    folded, n_class = fold_params(params)
    folded = jax.tree_util.tree_map(jax.block_until_ready, folded)

    # emb_data: integer category indices, one column per embedding layer
    max_cards = jnp.array([c for c, _ in emb_dims], dtype=jnp.int32)
    emb_data = jax.random.randint(ke, (batch, len(emb_dims)), 0, 5, dtype=jnp.int32)
    emb_data = jnp.minimum(emb_data, max_cards[None, :] - 1)

    cat_data = jax.random.normal(kc, (batch, num_cat_feature), jnp.float32)
    con_data = jax.random.normal(kn, (batch, num_con_feature), jnp.float32)

    out = multiclass_forward(folded, emb_data, cat_data, con_data,
                             num_class=n_class)
    out = jax.block_until_ready(out)
    assert out.shape == (batch, num_class), out.shape
    assert jnp.all(jnp.isfinite(out))
    print("KERNEL_OK")
</pallas_src>

<mosaic_0001>
module attributes {stable_mosaic.version = 11 : i64} {
  func.func @_mlp_kernel(%arg0: i32, %arg1: memref<8x15xbf16, #tpu.memory_space<vmem>>, %arg2: memref<8x16xf32, #tpu.memory_space<vmem>>, %arg3: memref<8x12xf32, #tpu.memory_space<vmem>>, %arg4: memref<15x128xbf16, #tpu.memory_space<vmem>>, %arg5: memref<16x128xbf16, #tpu.memory_space<vmem>>, %arg6: memref<12x128xbf16, #tpu.memory_space<vmem>>, %arg7: memref<1x128xf32, #tpu.memory_space<vmem>>, %arg8: memref<128x128xbf16, #tpu.memory_space<vmem>>, %arg9: memref<1x128xf32, #tpu.memory_space<vmem>>, %arg10: memref<128x128xbf16, #tpu.memory_space<vmem>>, %arg11: memref<1x128xf32, #tpu.memory_space<vmem>>, %arg12: memref<8x128xbf16, #tpu.memory_space<vmem>>) attributes {dimension_semantics = [#tpu.dimension_semantics<parallel>], iteration_bounds = array<i64: 1>, scalar_prefetch = 0 : i64, scratch_operands = 0 : i64, tpu.core_type = #tpu.core_type<tc>, window_params = [{transform_indices = @transform_0, window_bounds = array<i64: 8, 15>}, {transform_indices = @transform_1, window_bounds = array<i64: 8, 16>}, {transform_indices = @transform_2, window_bounds = array<i64: 8, 12>}, {pipeline_mode = #tpu.pipeline_mode<synchronous>, transform_indices = @transform_3, window_bounds = array<i64: 15, 128>}, {pipeline_mode = #tpu.pipeline_mode<synchronous>, transform_indices = @transform_4, window_bounds = array<i64: 16, 128>}, {pipeline_mode = #tpu.pipeline_mode<synchronous>, transform_indices = @transform_5, window_bounds = array<i64: 12, 128>}, {pipeline_mode = #tpu.pipeline_mode<synchronous>, transform_indices = @transform_6, window_bounds = array<i64: 1, 128>}, {pipeline_mode = #tpu.pipeline_mode<synchronous>, transform_indices = @transform_7, window_bounds = array<i64: 128, 128>}, {pipeline_mode = #tpu.pipeline_mode<synchronous>, transform_indices = @transform_8, window_bounds = array<i64: 1, 128>}, {pipeline_mode = #tpu.pipeline_mode<synchronous>, transform_indices = @transform_9, window_bounds = array<i64: 128, 128>}, {pipeline_mode = #tpu.pipeline_mode<synchronous>, transform_indices = @transform_10, window_bounds = array<i64: 1, 128>}, {transform_indices = @transform_11, window_bounds = array<i64: 8, 128>}]} {
    %c0 = arith.constant 0 : index
    %c0_0 = arith.constant 0 : index
    %0 = vector.load %arg1[%c0, %c0_0] : memref<8x15xbf16, #tpu.memory_space<vmem>>, vector<8x15xbf16>
    %c0_1 = arith.constant 0 : index
    %c0_2 = arith.constant 0 : index
    %1 = vector.load %arg4[%c0_1, %c0_2] : memref<15x128xbf16, #tpu.memory_space<vmem>>, vector<15x128xbf16>
    %cst = arith.constant dense<0.000000e+00> : vector<8x128xf32>
    %2 = tpu.matmul %0, %1, %cst {dimension_numbers = #tpu.dot_dimension_numbers<[1], [0], [0], [1], [0, 0, 1, 1], [], []>} : vector<8x15xbf16>, vector<15x128xbf16>, vector<8x128xf32> -> vector<8x128xf32>
    %c0_3 = arith.constant 0 : index
    %c0_4 = arith.constant 0 : index
    %3 = vector.load %arg2[%c0_3, %c0_4] : memref<8x16xf32, #tpu.memory_space<vmem>>, vector<8x16xf32>
    %4 = arith.truncf %3 : vector<8x16xf32> to vector<8x16xbf16>
    %c0_5 = arith.constant 0 : index
    %c0_6 = arith.constant 0 : index
    %5 = vector.load %arg5[%c0_5, %c0_6] : memref<16x128xbf16, #tpu.memory_space<vmem>>, vector<16x128xbf16>
    %cst_7 = arith.constant dense<0.000000e+00> : vector<8x128xf32>
    %6 = tpu.matmul %4, %5, %cst_7 {dimension_numbers = #tpu.dot_dimension_numbers<[1], [0], [0], [1], [0, 0, 1, 1], [], []>} : vector<8x16xbf16>, vector<16x128xbf16>, vector<8x128xf32> -> vector<8x128xf32>
    %7 = arith.addf %2, %6 : vector<8x128xf32>
    %c0_8 = arith.constant 0 : index
    %c0_9 = arith.constant 0 : index
    %8 = vector.load %arg3[%c0_8, %c0_9] : memref<8x12xf32, #tpu.memory_space<vmem>>, vector<8x12xf32>
    %9 = arith.truncf %8 : vector<8x12xf32> to vector<8x12xbf16>
    %c0_10 = arith.constant 0 : index
    %c0_11 = arith.constant 0 : index
    %10 = vector.load %arg6[%c0_10, %c0_11] : memref<12x128xbf16, #tpu.memory_space<vmem>>, vector<12x128xbf16>
    %cst_12 = arith.constant dense<0.000000e+00> : vector<8x128xf32>
    %11 = tpu.matmul %9, %10, %cst_12 {dimension_numbers = #tpu.dot_dimension_numbers<[1], [0], [0], [1], [0, 0, 1, 1], [], []>} : vector<8x12xbf16>, vector<12x128xbf16>, vector<8x128xf32> -> vector<8x128xf32>
    %12 = arith.addf %7, %11 : vector<8x128xf32>
    %c0_13 = arith.constant 0 : index
    %c0_14 = arith.constant 0 : index
    %13 = vector.load %arg7[%c0_13, %c0_14] : memref<1x128xf32, #tpu.memory_space<vmem>>, vector<1x128xf32>
    %14 = vector.broadcast %13 : vector<1x128xf32> to vector<8x128xf32>
    %15 = arith.addf %12, %14 : vector<8x128xf32>
    %cst_15 = arith.constant 0.000000e+00 : f32
    %16 = vector.broadcast %cst_15 : f32 to vector<8x128xf32>
    %17 = arith.cmpf ogt, %15, %16 : vector<8x128xf32>
    %cst_16 = arith.constant 0.00999999977 : f32
    %18 = vector.broadcast %cst_16 : f32 to vector<8x128xf32>
    %19 = arith.mulf %18, %15 : vector<8x128xf32>
    %20 = arith.select %17, %15, %19 : vector<8x128xi1>, vector<8x128xf32>
    %21 = arith.truncf %20 : vector<8x128xf32> to vector<8x128xbf16>
    %c0_17 = arith.constant 0 : index
    %c0_18 = arith.constant 0 : index
    %22 = vector.load %arg8[%c0_17, %c0_18] : memref<128x128xbf16, #tpu.memory_space<vmem>>, vector<128x128xbf16>
    %cst_19 = arith.constant dense<0.000000e+00> : vector<8x128xf32>
    %23 = tpu.matmul %21, %22, %cst_19 {dimension_numbers = #tpu.dot_dimension_numbers<[1], [0], [0], [1], [0, 0, 1, 1], [], []>} : vector<8x128xbf16>, vector<128x128xbf16>, vector<8x128xf32> -> vector<8x128xf32>
    %c0_20 = arith.constant 0 : index
    %c0_21 = arith.constant 0 : index
    %24 = vector.load %arg9[%c0_20, %c0_21] : memref<1x128xf32, #tpu.memory_space<vmem>>, vector<1x128xf32>
    %25 = vector.broadcast %24 : vector<1x128xf32> to vector<8x128xf32>
    %26 = arith.addf %23, %25 : vector<8x128xf32>
    %cst_22 = arith.constant 0.000000e+00 : f32
    %27 = vector.broadcast %cst_22 : f32 to vector<8x128xf32>
    %28 = arith.cmpf ogt, %26, %27 : vector<8x128xf32>
    %cst_23 = arith.constant 0.00999999977 : f32
    %29 = vector.broadcast %cst_23 : f32 to vector<8x128xf32>
    %30 = arith.mulf %29, %26 : vector<8x128xf32>
    %31 = arith.select %28, %26, %30 : vector<8x128xi1>, vector<8x128xf32>
    %32 = arith.truncf %31 : vector<8x128xf32> to vector<8x128xbf16>
    %c0_24 = arith.constant 0 : index
    %c0_25 = arith.constant 0 : index
    %33 = vector.load %arg10[%c0_24, %c0_25] : memref<128x128xbf16, #tpu.memory_space<vmem>>, vector<128x128xbf16>
    %cst_26 = arith.constant dense<0.000000e+00> : vector<8x128xf32>
    %34 = tpu.matmul %32, %33, %cst_26 {dimension_numbers = #tpu.dot_dimension_numbers<[1], [0], [0], [1], [0, 0, 1, 1], [], []>} : vector<8x128xbf16>, vector<128x128xbf16>, vector<8x128xf32> -> vector<8x128xf32>
    %c0_27 = arith.constant 0 : index
    %c0_28 = arith.constant 0 : index
    %35 = vector.load %arg11[%c0_27, %c0_28] : memref<1x128xf32, #tpu.memory_space<vmem>>, vector<1x128xf32>
    %36 = vector.broadcast %35 : vector<1x128xf32> to vector<8x128xf32>
    %37 = arith.addf %34, %36 : vector<8x128xf32>
    %38 = arith.truncf %37 : vector<8x128xf32> to vector<8x128xbf16>
    %c0_29 = arith.constant 0 : index
    %c0_30 = arith.constant 0 : index
    %39 = vector.load %arg12[%c0_29, %c0_30] : memref<8x128xbf16, #tpu.memory_space<vmem>>, vector<8x128xbf16>
    tpu.vector_store %arg12[%c0_29, %c0_30], %38 {strides = array<i32>} : memref<8x128xbf16, #tpu.memory_space<vmem>>, vector<8x128xbf16>,
    return
  }
  func.func @transform_0(%arg0: i32) -> (i32, i32) {
    %c0_i32 = arith.constant 0 : i32
    %c0_i32_0 = arith.constant 0 : i32
    return %arg0, %c0_i32 : i32, i32
  }
  func.func @transform_1(%arg0: i32) -> (i32, i32) {
    %c0_i32 = arith.constant 0 : i32
    %c0_i32_0 = arith.constant 0 : i32
    return %arg0, %c0_i32 : i32, i32
  }
  func.func @transform_2(%arg0: i32) -> (i32, i32) {
    %c0_i32 = arith.constant 0 : i32
    %c0_i32_0 = arith.constant 0 : i32
    return %arg0, %c0_i32 : i32, i32
  }
  func.func @transform_3(%arg0: i32) -> (i32, i32) {
    %c0_i32 = arith.constant 0 : i32
    %c0_i32_0 = arith.constant 0 : i32
    %c0_i32_1 = arith.constant 0 : i32
    return %c0_i32, %c0_i32_0 : i32, i32
  }
  func.func @transform_4(%arg0: i32) -> (i32, i32) {
    %c0_i32 = arith.constant 0 : i32
    %c0_i32_0 = arith.constant 0 : i32
    %c0_i32_1 = arith.constant 0 : i32
    return %c0_i32, %c0_i32_0 : i32, i32
  }
  func.func @transform_5(%arg0: i32) -> (i32, i32) {
    %c0_i32 = arith.constant 0 : i32
    %c0_i32_0 = arith.constant 0 : i32
    %c0_i32_1 = arith.constant 0 : i32
    return %c0_i32, %c0_i32_0 : i32, i32
  }
  func.func @transform_6(%arg0: i32) -> (i32, i32) {
    %c0_i32 = arith.constant 0 : i32
    %c0_i32_0 = arith.constant 0 : i32
    %c0_i32_1 = arith.constant 0 : i32
    return %c0_i32, %c0_i32_0 : i32, i32
  }
  func.func @transform_7(%arg0: i32) -> (i32, i32) {
    %c0_i32 = arith.constant 0 : i32
    %c0_i32_0 = arith.constant 0 : i32
    %c0_i32_1 = arith.constant 0 : i32
    return %c0_i32, %c0_i32_0 : i32, i32
  }
  func.func @transform_8(%arg0: i32) -> (i32, i32) {
    %c0_i32 = arith.constant 0 : i32
    %c0_i32_0 = arith.constant 0 : i32
    %c0_i32_1 = arith.constant 0 : i32
    return %c0_i32, %c0_i32_0 : i32, i32
  }
  func.func @transform_9(%arg0: i32) -> (i32, i32) {
    %c0_i32 = arith.constant 0 : i32
    %c0_i32_0 = arith.constant 0 : i32
    %c0_i32_1 = arith.constant 0 : i32
    return %c0_i32, %c0_i32_0 : i32, i32
  }
  func.func @transform_10(%arg0: i32) -> (i32, i32) {
    %c0_i32 = arith.constant 0 : i32
    %c0_i32_0 = arith.constant 0 : i32
    %c0_i32_1 = arith.constant 0 : i32
    return %c0_i32, %c0_i32_0 : i32, i32
  }
  func.func @transform_11(%arg0: i32) -> (i32, i32) {
    %c0_i32 = arith.constant 0 : i32
    %c0_i32_0 = arith.constant 0 : i32
    return %arg0, %c0_i32 : i32, i32
  }
}

</mosaic_0001>

<llo_original>
// kernel: multiclass_forward.1
$region0: #{multiclass_forward.1}
  #allocation0 [shape = 'u32[]', space=smem, size = 0x4, offset = 0x4, fixed_abs, tag = 'smem constant byte address 0x4 - core index']
  #allocation1 [shape = 'u32[72,128]{1,0:T(1,128)}', space=vmem, size = 0x9000, scoped, tag = 'internal scratch']
  %s0 = inlined_call_operand.vmem [shape: bf16[8,15], index: 0, kind: input, shape index: {}]
  %s1 = inlined_call_operand.vmem [shape: f32[8,16], index: 1, kind: input, shape index: {}]
  %s2 = inlined_call_operand.vmem [shape: f32[8,12], index: 2, kind: input, shape index: {}]
  %s3 = inlined_call_operand.vmem [shape: bf16[15,128], index: 3, kind: input, shape index: {}]
  %s4 = inlined_call_operand.vmem [shape: bf16[16,128], index: 4, kind: input, shape index: {}]
  %s5 = inlined_call_operand.vmem [shape: bf16[12,128], index: 5, kind: input, shape index: {}]
  %s6 = inlined_call_operand.vmem [shape: f32[1,128], index: 6, kind: input, shape index: {}]
  %s7 = inlined_call_operand.vmem [shape: bf16[128,128], index: 7, kind: input, shape index: {}]
  %s8 = inlined_call_operand.vmem [shape: f32[1,128], index: 8, kind: input, shape index: {}]
  %s9 = inlined_call_operand.hbm [shape: bf16[128,128], index: 9, kind: input, shape index: {}]
  %s10 = inlined_call_operand.vmem [shape: f32[1,128], index: 10, kind: input, shape index: {}]
  %s11 = inlined_call_operand.vmem [shape: bf16[8,128], index: 11, kind: output, shape index: {}]
  %s12 = sld [smem:[#allocation0]]
  $region58: #{multiclass_forward.1} parent=0
    _
  %s14 = ssub.s32 1, %s12
  %s15 = scalar_select 0, %s14, %s12
  $region1: #{multiclass_forward.1} parent=0
    #allocation2 [shape = 'u8[32768]{0}', space=vmem, size = 0x8000, scoped, tag = 'input window, operand 9, single buffered']
    #allocation3 [shape = 's32[1]{0}', space=sflag, size = 0x4, scoped, tag = 'scoped memory for multiclass_forward.1']
    %16 = vsyncpa [#allocation3], 0
    // Predicated region
    $region2: #{multiclass_forward.1} parent=1 // pred_check
      _
    $region3: #{multiclass_forward.1} parent=1 // pred_check_branch
      %18 = sbr.rel (0) target = $region5
    $region4: #{multiclass_forward.1} parent=1 // pred_region
      _
    $region5: #{multiclass_forward.1} parent=1 // pred_fallthru
      _
    // Predicated region
    $region6: #{multiclass_forward.1} parent=1 // pred_check
      _
    $region7: #{multiclass_forward.1} parent=1 // pred_check_branch
      %20 = sbr.rel (0) target = $region9
    $region8: #{multiclass_forward.1} parent=1 // pred_region
      _
    $region9: #{multiclass_forward.1} parent=1 // pred_fallthru
      _
    // Predicated region
    $region10: #{multiclass_forward.1} parent=1 // pred_check
      _
    $region11: #{multiclass_forward.1} parent=1 // pred_check_branch
      %22 = sbr.rel (0) target = $region13
    $region12: #{multiclass_forward.1} parent=1 // pred_region
      _
    $region13: #{multiclass_forward.1} parent=1 // pred_fallthru
      _
    // Predicated region
    $region14: #{multiclass_forward.1} parent=1 // pred_check
      _
    $region15: #{multiclass_forward.1} parent=1 // pred_check_branch
      %24 = sbr.rel (0) target = $region17
    $region16: #{multiclass_forward.1} parent=1 // pred_region
      _
    $region17: #{multiclass_forward.1} parent=1 // pred_fallthru
      _
    // Predicated region
    $region18: #{multiclass_forward.1} parent=1 // pred_check
      _
    $region19: #{multiclass_forward.1} parent=1 // pred_check_branch
      %26 = sbr.rel (0) target = $region21
    $region20: #{multiclass_forward.1} parent=1 // pred_region
      _
    $region21: #{multiclass_forward.1} parent=1 // pred_fallthru
      _
    // Predicated region
    $region22: #{multiclass_forward.1} parent=1 // pred_check
      _
    $region23: #{multiclass_forward.1} parent=1 // pred_check_branch
      %28 = sbr.rel (0) target = $region25
    $region24: #{multiclass_forward.1} parent=1 // pred_region
      _
    $region25: #{multiclass_forward.1} parent=1 // pred_fallthru
      _
    // Predicated region
    $region26: #{multiclass_forward.1} parent=1 // pred_check
      _
    $region27: #{multiclass_forward.1} parent=1 // pred_check_branch
      %30 = sbr.rel (0) target = $region29
    $region28: #{multiclass_forward.1} parent=1 // pred_region
      _
    $region29: #{multiclass_forward.1} parent=1 // pred_fallthru
      _
    // Predicated region
    $region30: #{multiclass_forward.1} parent=1 // pred_check
      _
    $region31: #{multiclass_forward.1} parent=1 // pred_check_branch
      %32 = sbr.rel (0) target = $region33
    $region32: #{multiclass_forward.1} parent=1 // pred_region
      _
    $region33: #{multiclass_forward.1} parent=1 // pred_fallthru
      _
    // Predicated region
    $region34: #{multiclass_forward.1} parent=1 // pred_check
      _
    $region35: #{multiclass_forward.1} parent=1 // pred_check_branch
      %34 = sbr.rel (0) target = $region37
    $region36: #{multiclass_forward.1} parent=1 // pred_region
      _
    $region37: #{multiclass_forward.1} parent=1 // pred_fallthru
      _
    // Predicated region
    $region38: #{multiclass_forward.1} parent=1 // pred_check
      _
    $region39: #{multiclass_forward.1} parent=1 // pred_check_branch
      %36 = sbr.rel (0) target = $region41
    $region40: #{multiclass_forward.1} parent=1 // pred_region
      %38 = vsyncadd [#allocation3], 0
      %s39 = sshll.u32 %s9, 4
      %s40 = int_to_ptr.hbm [resolvable:$true] %s39
      %s41 = sshll.u32 [#allocation2], 4
      %s42 = int_to_ptr.vmem [resolvable:$true] %s41
      %47 = dma.hbm_to_vmem [thread:$0]  %s40, 1024, %s42, [#allocation3], 64, 64, 4
    $region41: #{multiclass_forward.1} parent=1 // pred_fallthru
      _
    // Predicated region
    $region42: #{multiclass_forward.1} parent=1 // pred_check
      _
    $region43: #{multiclass_forward.1} parent=1 // pred_check_branch
      %49 = sbr.rel (0) target = $region45
    $region44: #{multiclass_forward.1} parent=1 // pred_region
      _
    $region45: #{multiclass_forward.1} parent=1 // pred_fallthru
      _
    // Predicated region
    $region46: #{multiclass_forward.1} parent=1 // pred_check
      _
    $region47: #{multiclass_forward.1} parent=1 // pred_check_branch
      %51 = sbr.rel (0) target = $region49
    $region48: #{multiclass_forward.1} parent=1 // pred_region
      %53 = dma.done [#allocation3], 1024
    $region49: #{multiclass_forward.1} parent=1 // pred_fallthru
      _
    %v55 = vld [vmem:[%s0] sm:$0xf]
    %v56 = vld [vmem:[%s3] sm:$0xf]
    %v57 = vld [vmem:[%s3 + $0x4] sm:$0xf]
    %v58 = vld [vmem:[%s1] sm:$0xff]
    %v59 = vpack.c.bf16 %v58, %v58
    %v60 = vld [vmem:[%s4] sm:$0xf]
    %v61 = vld [vmem:[%s4 + $0x4] sm:$0xf]
    %v64 = vunpack.c.l.b16 %v60
    %v65 = vunpack.c.l.b16 %v61
    %v66 = vpack.c.b16 %v65, %v64
    %vm68 = vcmask 130048
    %v70 = vsel %vm68, %v59, 0
    %72 = vmatpush.bf16.msra.mxu0 0
    %73 = vmatpush.bf16.msra.mxu0 0
    %74 = vmatpush.bf16.msra.mxu0 0
    %75 = vmatpush.bf16.msra.mxu0 0
    %76 = vmatpush.bf16.msra.mxu0 0
    %77 = vmatpush.bf16.msra.mxu0 0
    %78 = vmatpush.bf16.msra.mxu0 0
    %79 = vmatpush.bf16.msra.mxu0 %v66
    %80 = vmatmul.bf16.gmra.mxu0 %v70
    %v81 = vpop.f32.mrf.mxu0
    %v82 = vadd.f32 0.0, %v81
    %v83 = vpop.f32.mrf.mxu0
    %84 = vdwg.mxu0
    %v87 = vunpack.c.l.b16 %v56
    %v88 = vunpack.c.l.b16 %v57
    %v89 = vpack.c.b16 %v88, %v87
    %vm90 = vcmask 121856
    %v92 = vsel %vm90, %v55, 0
    %vm94 = vcmask 1046528
    %vm95 = vcmask 1047552
    %v96 = vsel %vm94, 4294967295, 65535
    %v97 = vsel %vm95, %v96, 0
    %v99 = vand.u32 %v89, %v97
    %101 = vmatpush.bf16.msra.mxu0 0
    %102 = vmatpush.bf16.msra.mxu0 0
    %103 = vmatpush.bf16.msra.mxu0 0
    %104 = vmatpush.bf16.msra.mxu0 0
    %105 = vmatpush.bf16.msra.mxu0 0
    %106 = vmatpush.bf16.msra.mxu0 0
    %107 = vmatpush.bf16.msra.mxu0 0
    %108 = vmatpush.bf16.msra.mxu0 %v99
    %109 = vmatmul.bf16.gmra.mxu0 %v92
    %v110 = vpop.f32.mrf.mxu0
    %v111 = vadd.f32 %v82, %v110
    %v112 = vpop.f32.mrf.mxu0
    %113 = vdwg.mxu0
    %v114 = vld [vmem:[%s2] sm:$0xff]
    %v115 = vpack.c.bf16 %v114, %v114
    %v116 = vld [vmem:[%s5] sm:$0xf]
    %v117 = vld [vmem:[%s5 + $0x4] sm:$0x3]
    %v120 = vunpack.c.l.b16 %v116
    %v121 = vunpack.c.l.b16 %v117
    %v122 = vpack.c.b16 %v121, %v120
    %vm123 = vcmask 97280
    %v125 = vsel %vm123, %v115, 0
    %vm127 = vcmask 1045504
    %v129 = vsel %vm127, %v122, 0
    %131 = vmatpush.bf16.msra.mxu0 0
    %132 = vmatpush.bf16.msra.mxu0 0
    %133 = vmatpush.bf16.msra.mxu0 0
    %134 = vmatpush.bf16.msra.mxu0 0
    %135 = vmatpush.bf16.msra.mxu0 0
    %136 = vmatpush.bf16.msra.mxu0 0
    %137 = vmatpush.bf16.msra.mxu0 0
    %138 = vmatpush.bf16.msra.mxu0 %v129
    %139 = vmatmul.bf16.gmra.mxu0 %v125
    %v140 = vpop.f32.mrf.mxu0
    %v141 = vadd.f32 0.0, %v140
    %v142 = vpop.f32.mrf.mxu0
    %143 = vdwg.mxu0
    %v144 = vadd.f32 %v111, %v141
    %v145 = vld [vmem:[%s6] sm:$0x1]
    %v147 = vperm.slane %v145, 0
    %v149 = vadd.f32 %v144, %v147
    %vm150 = vcmp.gt.f32.partialorder %v149, 0.0
    %v151 = vmul.f32 %v149, 0.01
    %v152 = vsel %vm150, %v149, %v151
    %v153 = vpack.c.bf16 %v152, %v152
    %v154 = vld [vmem:[%s7] sm:$0xf]
    %v155 = vld [vmem:[%s7 + $0x4] sm:$0xf]
    %v156 = vld [vmem:[%s7 + $0x8] sm:$0xf]
    %v157 = vld [vmem:[%s7 + $0xc] sm:$0xf]
    %v158 = vld [vmem:[%s7 + $0x10] sm:$0xf]
    %v159 = vld [vmem:[%s7 + $0x14] sm:$0xf]
    %v160 = vld [vmem:[%s7 + $0x18] sm:$0xf]
    %v161 = vld [vmem:[%s7 + $0x1c] sm:$0xf]
    %v162 = vld [vmem:[%s7 + $0x20] sm:$0xf]
    %v163 = vld [vmem:[%s7 + $0x24] sm:$0xf]
    %v164 = vld [vmem:[%s7 + $0x28] sm:$0xf]
    %v165 = vld [vmem:[%s7 + $0x2c] sm:$0xf]
    %v166 = vld [vmem:[%s7 + $0x30] sm:$0xf]
    %v167 = vld [vmem:[%s7 + $0x34] sm:$0xf]
    %v168 = vld [vmem:[%s7 + $0x38] sm:$0xf]
    %v169 = vld [vmem:[%s7 + $0x3c] sm:$0xf]
    %v170 = vld [vmem:[%s8] sm:$0x1]
    %v172 = vperm.slane %v170, 0
    %v190 = vunpack.c.l.b16 %v154
    %v191 = vunpack.c.l.b16 %v155
    %v192 = vunpack.c.l.b16 %v156
    %v193 = vunpack.c.l.b16 %v157
    %v194 = vunpack.c.l.b16 %v158
    %v195 = vunpack.c.l.b16 %v159
    %v196 = vunpack.c.l.b16 %v160
    %v197 = vunpack.c.l.b16 %v161
    %v198 = vunpack.c.l.b16 %v162
    %v199 = vunpack.c.l.b16 %v163
    %v200 = vunpack.c.l.b16 %v164
    %v201 = vunpack.c.l.b16 %v165
    %v202 = vunpack.c.l.b16 %v166
    %v203 = vunpack.c.l.b16 %v167
    %v204 = vunpack.c.l.b16 %v168
    %v205 = vunpack.c.l.b16 %v169
    %v206 = vpack.c.b16 %v191, %v190
    %v207 = vpack.c.b16 %v193, %v192
    %v208 = vpack.c.b16 %v195, %v194
    %v209 = vpack.c.b16 %v197, %v196
    %v210 = vpack.c.b16 %v199, %v198
    %v211 = vpack.c.b16 %v201, %v200
    %v212 = vpack.c.b16 %v203, %v202
    %v213 = vpack.c.b16 %v205, %v204
    %222 = vmatpush.bf16.msra.mxu0 %v213
    %223 = vmatpush.bf16.msra.mxu0 %v212
    %224 = vmatpush.bf16.msra.mxu0 %v211
    %225 = vmatpush.bf16.msra.mxu0 %v210
    %226 = vmatpush.bf16.msra.mxu0 %v209
    %227 = vmatpush.bf16.msra.mxu0 %v208
    %228 = vmatpush.bf16.msra.mxu0 %v207
    %229 = vmatpush.bf16.msra.mxu0 %v206
    %230 = vmatmul.bf16.gmra.mxu0 %v153
    %v231 = vpop.f32.mrf.mxu0
    %v232 = vadd.f32 %v172, %v231
    %v233 = vpop.f32.mrf.mxu0
    %234 = vdwg.mxu0
    %vm235 = vcmp.gt.f32.partialorder %v232, 0.0
    %v236 = vmul.f32 %v232, 0.01
    %v237 = vsel %vm235, %v232, %v236
    %v238 = vpack.c.bf16 %v237, %v237
    %v239 = vld [vmem:[#allocation2] sm:$0xf]
    %v240 = vld [vmem:[#allocation2 + $0x4] sm:$0xf]
    %v241 = vld [vmem:[#allocation2 + $0x8] sm:$0xf]
    %v242 = vld [vmem:[#allocation2 + $0xc] sm:$0xf]
    %v243 = vld [vmem:[#allocation2 + $0x10] sm:$0xf]
    %v244 = vld [vmem:[#allocation2 + $0x14] sm:$0xf]
    %v245 = vld [vmem:[#allocation2 + $0x18] sm:$0xf]
    %v246 = vld [vmem:[#allocation2 + $0x1c] sm:$0xf]
    %v247 = vld [vmem:[#allocation2 + $0x20] sm:$0xf]
    %v248 = vld [vmem:[#allocation2 + $0x24] sm:$0xf]
    %v249 = vld [vmem:[#allocation2 + $0x28] sm:$0xf]
    %v250 = vld [vmem:[#allocation2 + $0x2c] sm:$0xf]
    %v251 = vld [vmem:[#allocation2 + $0x30] sm:$0xf]
    %v252 = vld [vmem:[#allocation2 + $0x34] sm:$0xf]
    %v253 = vld [vmem:[#allocation2 + $0x38] sm:$0xf]
    %v254 = vld [vmem:[#allocation2 + $0x3c] sm:$0xf]
    %v255 = vld [vmem:[%s10] sm:$0x1]
    %v257 = vperm.slane %v255, 0
    %v275 = vunpack.c.l.b16 %v239
    %v276 = vunpack.c.l.b16 %v240
    %v277 = vunpack.c.l.b16 %v241
    %v278 = vunpack.c.l.b16 %v242
    %v279 = vunpack.c.l.b16 %v243
    %v280 = vunpack.c.l.b16 %v244
    %v281 = vunpack.c.l.b16 %v245
    %v282 = vunpack.c.l.b16 %v246
    %v283 = vunpack.c.l.b16 %v247
    %v284 = vunpack.c.l.b16 %v248
    %v285 = vunpack.c.l.b16 %v249
    %v286 = vunpack.c.l.b16 %v250
    %v287 = vunpack.c.l.b16 %v251
    %v288 = vunpack.c.l.b16 %v252
    %v289 = vunpack.c.l.b16 %v253
    %v290 = vunpack.c.l.b16 %v254
    %v291 = vpack.c.b16 %v276, %v275
    %v292 = vpack.c.b16 %v278, %v277
    %v293 = vpack.c.b16 %v280, %v279
    %v294 = vpack.c.b16 %v282, %v281
    %v295 = vpack.c.b16 %v284, %v283
    %v296 = vpack.c.b16 %v286, %v285
    %v297 = vpack.c.b16 %v288, %v287
    %v298 = vpack.c.b16 %v290, %v289
    %307 = vmatpush.bf16.msra.mxu0 %v298
    %308 = vmatpush.bf16.msra.mxu0 %v297
    %309 = vmatpush.bf16.msra.mxu0 %v296
    %310 = vmatpush.bf16.msra.mxu0 %v295
    %311 = vmatpush.bf16.msra.mxu0 %v294
    %312 = vmatpush.bf16.msra.mxu0 %v293
    %313 = vmatpush.bf16.msra.mxu0 %v292
    %314 = vmatpush.bf16.msra.mxu0 %v291
    %315 = vmatmul.bf16.gmra.mxu0 %v238
    %v316 = vpop.f32.mrf.mxu0
    %v317 = vadd.f32 %v257, %v316
    %v318 = vpop.f32.mrf.mxu0
    %319 = vdwg.mxu0
    %v320 = vpack.c.bf16 %v317, %v317
    %321 = vst [vmem:[%s11] sm:$0xf] %v320
    // Predicated region
    $region50: #{multiclass_forward.1} parent=1 // pred_check
      _
    $region51: #{multiclass_forward.1} parent=1 // pred_check_branch
      %323 = sbr.rel (0) target = $region53
    $region52: #{multiclass_forward.1} parent=1 // pred_region
      _
    $region53: #{multiclass_forward.1} parent=1 // pred_fallthru
      _
    // Predicated region
    $region54: #{multiclass_forward.1} parent=1 // pred_check
      _
    $region55: #{multiclass_forward.1} parent=1 // pred_check_branch
      %325 = sbr.rel (0) target = $region57
    $region56: #{multiclass_forward.1} parent=1 // pred_region
      _
    $region57: #{multiclass_forward.1} parent=1 // pred_fallthru
      _
    %326 = vsyncpa [#allocation3], 1

</llo_original>
